<compile_context>
chip_gen: v5e
topology: v5e:2x2
jax: 0.10.0
libtpu: 0.0.40
codegen_flags: <defaults>
</compile_context>

<pallas_src>
import functools

import jax
import jax.numpy as jnp
from jax.experimental import pallas as pl
from jax.experimental.pallas import tpu as pltpu


# ----------------------------------------------------------------------------
# Pass 1: input projection (parallel over T, off the recurrent critical path)
# ----------------------------------------------------------------------------
def input_proj_kernel(xe_ref, wih_t_ref, b_ref, gx_ref):
    # xe_ref: (B, E) for this timestep, wih_t_ref: (E, 4H), b_ref: (1, 4H)
    gx_ref[...] = (
        jnp.dot(xe_ref[...], wih_t_ref[...], preferred_element_type=jnp.float32)
        + b_ref[...]
    ).astype(gx_ref.dtype)


# ----------------------------------------------------------------------------
# Pass 2: LSTM recurrence over T (grid axis, "arbitrary") + fused final Linear
# ----------------------------------------------------------------------------
def lstm_recurrent_kernel(gx_ref, whh_t_ref, wfc_t_ref, bfc_ref, out_ref, h_ref, c_ref):
    """gx_ref    : (B, 4H)   precomputed x-projection + bias for step t (streamed)
       whh_t_ref : (H, 4H)   recurrent weights, resident
       wfc_t_ref : (H, Opad) fc weights (lane-padded), resident
       bfc_ref   : (1, Opad) fc bias (lane-padded), resident
       out_ref   : (B, Opad) output, written at the last step
       h_ref,c_ref: (B, H)   persistent VMEM scratch carrying state across grid steps
    """
    t = pl.program_id(0)
    T = pl.num_programs(0)
    H = whh_t_ref.shape[0]

    @pl.when(t == 0)
    def _():
        h_ref[...] = jnp.zeros_like(h_ref)
        c_ref[...] = jnp.zeros_like(c_ref)

    h = h_ref[...]
    c = c_ref[...]

    # Single fused recurrent matmul: (B, H) x (H, 4H). Gate slices fall on
    # 128-lane boundaries whenever H is a multiple of 128.
    gates = gx_ref[...] + jnp.dot(h, whh_t_ref[...], preferred_element_type=jnp.float32)

    i_g = jax.nn.sigmoid(gates[:, 0 * H:1 * H])
    f_g = jax.nn.sigmoid(gates[:, 1 * H:2 * H])
    g_g = jnp.tanh(gates[:, 2 * H:3 * H])
    o_g = jax.nn.sigmoid(gates[:, 3 * H:4 * H])

    c_new = f_g * c + i_g * g_g
    h_new = o_g * jnp.tanh(c_new)
    h_ref[...] = h_new
    c_ref[...] = c_new

    @pl.when(t == T - 1)
    def _():
        out_ref[...] = (
            jnp.dot(h_new, wfc_t_ref[...], preferred_element_type=jnp.float32)
            + bfc_ref[...]
        ).astype(out_ref.dtype)


def _round_up(x, m):
    return ((x + m - 1) // m) * m


def _vmem_limit_bytes(needed):
    # generous headroom, but stay under v7x's 64 MiB physical VMEM
    return int(min(max(4 * needed + (4 << 20), 8 << 20), 48 << 20))


@functools.partial(jax.jit, static_argnames=())
def torch_lstm_forward(tokens, params):
    """tokens: (B, T) int32. Returns (B, output_dim) float32 == fc(h_T)."""
    emb = jnp.take(params["embedding"], tokens, axis=0)       # (B, T, E)
    xe = jnp.transpose(emb, (1, 0, 2)).astype(jnp.float32)    # (T, B, E) time-major

    T, B, E = xe.shape
    H = params["w_hh"].shape[1]
    O = params["w_fc"].shape[0]
    G = 4 * H
    O_pad = _round_up(max(O, 128), 128)                       # lane-dense output slab

    wih_t = params["w_ih"].T.astype(jnp.float32)              # (E, 4H)
    whh_t = params["w_hh"].T.astype(jnp.float32)              # (H, 4H)
    b = (params["b_ih"] + params["b_hh"]).reshape(1, G).astype(jnp.float32)
    wfc_t = jnp.zeros((H, O_pad), jnp.float32).at[:, :O].set(params["w_fc"].T)
    bfc = jnp.zeros((1, O_pad), jnp.float32).at[:, :O].set(params["b_fc"].reshape(1, O))

    # ---------------- pass 1: x-projection, gridded (parallel) over T ----------------
    proj_needed = 4 * (2 * B * E + E * G + G + 2 * B * G)     # f32 bytes (2x streamed bufs)
    gates_x = pl.pallas_call(
        input_proj_kernel,
        out_shape=jax.ShapeDtypeStruct((T, B, G), jnp.float32),
        grid_spec=pltpu.PrefetchScalarGridSpec(
            num_scalar_prefetch=0,
            grid=(T,),
            in_specs=[
                pl.BlockSpec((None, B, E), lambda t: (t, 0, 0)),   # streamed x_t
                pl.BlockSpec((E, G), lambda t: (0, 0)),            # resident W_ih^T
                pl.BlockSpec((1, G), lambda t: (0, 0)),            # resident bias
            ],
            out_specs=pl.BlockSpec((None, B, G), lambda t: (t, 0, 0)),
        ),
        compiler_params=pltpu.CompilerParams(
            dimension_semantics=("parallel",),
            vmem_limit_bytes=_vmem_limit_bytes(proj_needed),
        ),
    )(xe, wih_t, b)

    # ---------------- pass 2: recurrence + fused FC, gridded (arbitrary) over T ------
    rec_needed = 4 * (2 * B * G + H * G + H * O_pad + O_pad + B * O_pad + 2 * B * H)
    out_pad = pl.pallas_call(
        lstm_recurrent_kernel,
        out_shape=jax.ShapeDtypeStruct((B, O_pad), jnp.float32),
        grid_spec=pltpu.PrefetchScalarGridSpec(
            num_scalar_prefetch=0,
            grid=(T,),
            in_specs=[
                pl.BlockSpec((None, B, G), lambda t: (t, 0, 0)),   # streamed gates_x[t]
                pl.BlockSpec((H, G), lambda t: (0, 0)),            # resident W_hh^T
                pl.BlockSpec((H, O_pad), lambda t: (0, 0)),        # resident W_fc^T (padded)
                pl.BlockSpec((1, O_pad), lambda t: (0, 0)),        # resident b_fc (padded)
            ],
            out_specs=pl.BlockSpec((B, O_pad), lambda t: (0, 0)),
            scratch_shapes=[
                pltpu.VMEM((B, H), jnp.float32),                   # h carry
                pltpu.VMEM((B, H), jnp.float32),                   # c carry
            ],
        ),
        compiler_params=pltpu.CompilerParams(
            dimension_semantics=("arbitrary",),
            vmem_limit_bytes=_vmem_limit_bytes(rec_needed),
        ),
    )(gates_x, whh_t, wfc_t, bfc)

    return out_pad[:, :O]


# ----------------------------------------------------------------------------
# Parameters + pure-JAX reference (mirrors nn.Embedding + nn.LSTM + nn.Linear)
# ----------------------------------------------------------------------------
def make_params(key, vocab_size, embedding_dim, hidden_dim, output_dim):
    ks = jax.random.split(key, 7)
    s = 0.1
    return {
        "embedding": jax.random.normal(ks[0], (vocab_size, embedding_dim), jnp.float32),
        # PyTorch gate order in stacked weights: [i, f, g, o]
        "w_ih": s * jax.random.normal(ks[1], (4 * hidden_dim, embedding_dim), jnp.float32),
        "w_hh": s * jax.random.normal(ks[2], (4 * hidden_dim, hidden_dim), jnp.float32),
        "b_ih": s * jax.random.normal(ks[3], (4 * hidden_dim,), jnp.float32),
        "b_hh": s * jax.random.normal(ks[4], (4 * hidden_dim,), jnp.float32),
        "w_fc": s * jax.random.normal(ks[5], (output_dim, hidden_dim), jnp.float32),
        "b_fc": s * jax.random.normal(ks[6], (output_dim,), jnp.float32),
    }


def reference_forward(tokens, params):
    emb = jnp.take(params["embedding"], tokens, axis=0)  # (B, T, E)
    B, T, E = emb.shape
    H = params["w_hh"].shape[1]
    h = jnp.zeros((B, H), jnp.float32)
    c = jnp.zeros((B, H), jnp.float32)
    for t in range(T):
        x_t = emb[:, t, :]
        gates = (
            x_t @ params["w_ih"].T + params["b_ih"]
            + h @ params["w_hh"].T + params["b_hh"]
        )
        i_g = jax.nn.sigmoid(gates[:, 0 * H:1 * H])
        f_g = jax.nn.sigmoid(gates[:, 1 * H:2 * H])
        g_g = jnp.tanh(gates[:, 2 * H:3 * H])
        o_g = jax.nn.sigmoid(gates[:, 3 * H:4 * H])
        c = f_g * c + i_g * g_g
        h = o_g * jnp.tanh(c)
    return h @ params["w_fc"].T + params["b_fc"]


if __name__ == "__main__":
    vocab_size, embedding_dim, hidden_dim, output_dim = 64, 32, 32, 8
    batch, seq = 8, 8

    key = jax.random.PRNGKey(0)
    k_params, k_tokens = jax.random.split(key)
    params = make_params(k_params, vocab_size, embedding_dim, hidden_dim, output_dim)
    tokens = jax.random.randint(k_tokens, (batch, seq), 0, vocab_size, dtype=jnp.int32)

    out = torch_lstm_forward(tokens, params)
    out = jax.block_until_ready(out)

    ref = reference_forward(tokens, params)
    assert out.shape == (batch, output_dim)
    assert jnp.allclose(out, ref, atol=1e-5, rtol=1e-5), "Pallas output mismatch vs reference"

    print("KERNEL_OK")
</pallas_src>

<mosaic_0001>
module attributes {stable_mosaic.version = 11 : i64} {
  func.func @input_proj_kernel(%arg0: i32, %arg1: memref<1x8x32xf32, #tpu.memory_space<vmem>>, %arg2: memref<32x128xf32, #tpu.memory_space<vmem>>, %arg3: memref<1x128xf32, #tpu.memory_space<vmem>>, %arg4: memref<1x8x128xf32, #tpu.memory_space<vmem>>) attributes {dimension_semantics = [#tpu.dimension_semantics<parallel>], iteration_bounds = array<i64: 8>, scalar_prefetch = 0 : i64, scratch_operands = 0 : i64, tpu.core_type = #tpu.core_type<tc>, window_params = [{transform_indices = @transform_0, window_bounds = array<i64: 1, 8, 32>}, {pipeline_mode = #tpu.pipeline_mode<synchronous>, transform_indices = @transform_1, window_bounds = array<i64: 32, 128>}, {pipeline_mode = #tpu.pipeline_mode<synchronous>, transform_indices = @transform_2, window_bounds = array<i64: 1, 128>}, {transform_indices = @transform_3, window_bounds = array<i64: 1, 8, 128>}]} {
    %c0 = arith.constant 0 : index
    %c0_0 = arith.constant 0 : index
    %c0_1 = arith.constant 0 : index
    %0 = vector.load %arg1[%c0, %c0_0, %c0_1] : memref<1x8x32xf32, #tpu.memory_space<vmem>>, vector<1x8x32xf32>
    %1 = vector.shape_cast %0 : vector<1x8x32xf32> to vector<8x32xf32>
    %c0_2 = arith.constant 0 : index
    %c0_3 = arith.constant 0 : index
    %2 = vector.load %arg2[%c0_2, %c0_3] : memref<32x128xf32, #tpu.memory_space<vmem>>, vector<32x128xf32>
    %cst = arith.constant dense<0.000000e+00> : vector<8x128xf32>
    %3 = tpu.matmul %1, %2, %cst {dimension_numbers = #tpu.dot_dimension_numbers<[1], [0], [0], [1], [0, 0, 1, 1], [], []>} : vector<8x32xf32>, vector<32x128xf32>, vector<8x128xf32> -> vector<8x128xf32>
    %c0_4 = arith.constant 0 : index
    %c0_5 = arith.constant 0 : index
    %4 = vector.load %arg3[%c0_4, %c0_5] : memref<1x128xf32, #tpu.memory_space<vmem>>, vector<1x128xf32>
    %5 = vector.broadcast %4 : vector<1x128xf32> to vector<8x128xf32>
    %6 = arith.addf %3, %5 : vector<8x128xf32>
    %c0_6 = arith.constant 0 : index
    %c0_7 = arith.constant 0 : index
    %c0_8 = arith.constant 0 : index
    %7 = vector.load %arg4[%c0_6, %c0_7, %c0_8] : memref<1x8x128xf32, #tpu.memory_space<vmem>>, vector<1x8x128xf32>
    %8 = vector.shape_cast %7 : vector<1x8x128xf32> to vector<8x128xf32>
    %9 = vector.shape_cast %6 : vector<8x128xf32> to vector<1x8x128xf32>
    tpu.vector_store %arg4[%c0_6, %c0_7, %c0_8], %9 {strides = array<i32>} : memref<1x8x128xf32, #tpu.memory_space<vmem>>, vector<1x8x128xf32>,
    return
  }
  func.func @transform_0(%arg0: i32) -> (i32, i32, i32) {
    %c0_i32 = arith.constant 0 : i32
    %c0_i32_0 = arith.constant 0 : i32
    %c0_i32_1 = arith.constant 0 : i32
    return %arg0, %c0_i32, %c0_i32_0 : i32, i32, i32
  }
  func.func @transform_1(%arg0: i32) -> (i32, i32) {
    %c0_i32 = arith.constant 0 : i32
    %c0_i32_0 = arith.constant 0 : i32
    %c0_i32_1 = arith.constant 0 : i32
    return %c0_i32, %c0_i32_0 : i32, i32
  }
  func.func @transform_2(%arg0: i32) -> (i32, i32) {
    %c0_i32 = arith.constant 0 : i32
    %c0_i32_0 = arith.constant 0 : i32
    %c0_i32_1 = arith.constant 0 : i32
    return %c0_i32, %c0_i32_0 : i32, i32
  }
  func.func @transform_3(%arg0: i32) -> (i32, i32, i32) {
    %c0_i32 = arith.constant 0 : i32
    %c0_i32_0 = arith.constant 0 : i32
    %c0_i32_1 = arith.constant 0 : i32
    return %arg0, %c0_i32, %c0_i32_0 : i32, i32, i32
  }
}

module attributes {stable_mosaic.version = 11 : i64} {
  func.func @lstm_recurrent_kernel(%arg0: i32, %arg1: memref<1x8x128xf32, #tpu.memory_space<vmem>>, %arg2: memref<32x128xf32, #tpu.memory_space<vmem>>, %arg3: memref<32x128xf32, #tpu.memory_space<vmem>>, %arg4: memref<1x128xf32, #tpu.memory_space<vmem>>, %arg5: memref<8x128xf32, #tpu.memory_space<vmem>>, %arg6: memref<8x32xf32, #tpu.memory_space<vmem>>, %arg7: memref<8x32xf32, #tpu.memory_space<vmem>>) attributes {dimension_semantics = [#tpu.dimension_semantics<arbitrary>], iteration_bounds = array<i64: 8>, scalar_prefetch = 0 : i64, scratch_operands = 2 : i64, tpu.core_type = #tpu.core_type<tc>, window_params = [{transform_indices = @transform_0, window_bounds = array<i64: 1, 8, 128>}, {pipeline_mode = #tpu.pipeline_mode<synchronous>, transform_indices = @transform_1, window_bounds = array<i64: 32, 128>}, {pipeline_mode = #tpu.pipeline_mode<synchronous>, transform_indices = @transform_2, window_bounds = array<i64: 32, 128>}, {pipeline_mode = #tpu.pipeline_mode<synchronous>, transform_indices = @transform_3, window_bounds = array<i64: 1, 128>}, {pipeline_mode = #tpu.pipeline_mode<synchronous>, transform_indices = @transform_4, window_bounds = array<i64: 8, 128>}]} {
    %c0_i32 = arith.constant 0 : i32
    %0 = arith.cmpi eq, %arg0, %c0_i32 : i32
    %1 = arith.extui %0 : i1 to i32
    %c0_i32_0 = arith.constant 0 : i32
    %2 = arith.cmpi ne, %1, %c0_i32_0 : i32
    scf.if %2 {
      %cst_17 = arith.constant 0.000000e+00 : f32
      %40 = vector.broadcast %cst_17 : f32 to vector<8x32xf32>
      %c0_18 = arith.constant 0 : index
      %c0_19 = arith.constant 0 : index
      %41 = vector.load %arg6[%c0_18, %c0_19] : memref<8x32xf32, #tpu.memory_space<vmem>>, vector<8x32xf32>
      tpu.vector_store %arg6[%c0_18, %c0_19], %40 {strides = array<i32>} : memref<8x32xf32, #tpu.memory_space<vmem>>, vector<8x32xf32>,
      %cst_20 = arith.constant 0.000000e+00 : f32
      %42 = vector.broadcast %cst_20 : f32 to vector<8x32xf32>
      %c0_21 = arith.constant 0 : index
      %c0_22 = arith.constant 0 : index
      %43 = vector.load %arg7[%c0_21, %c0_22] : memref<8x32xf32, #tpu.memory_space<vmem>>, vector<8x32xf32>
      tpu.vector_store %arg7[%c0_21, %c0_22], %42 {strides = array<i32>} : memref<8x32xf32, #tpu.memory_space<vmem>>, vector<8x32xf32>,
    } else {
    }
    %c0 = arith.constant 0 : index
    %c0_1 = arith.constant 0 : index
    %3 = vector.load %arg6[%c0, %c0_1] : memref<8x32xf32, #tpu.memory_space<vmem>>, vector<8x32xf32>
    %c0_2 = arith.constant 0 : index
    %c0_3 = arith.constant 0 : index
    %4 = vector.load %arg7[%c0_2, %c0_3] : memref<8x32xf32, #tpu.memory_space<vmem>>, vector<8x32xf32>
    %c0_4 = arith.constant 0 : index
    %c0_5 = arith.constant 0 : index
    %c0_6 = arith.constant 0 : index
    %5 = vector.load %arg1[%c0_4, %c0_5, %c0_6] : memref<1x8x128xf32, #tpu.memory_space<vmem>>, vector<1x8x128xf32>
    %6 = vector.shape_cast %5 : vector<1x8x128xf32> to vector<8x128xf32>
    %c0_7 = arith.constant 0 : index
    %c0_8 = arith.constant 0 : index
    %7 = vector.load %arg2[%c0_7, %c0_8] : memref<32x128xf32, #tpu.memory_space<vmem>>, vector<32x128xf32>
    %cst = arith.constant dense<0.000000e+00> : vector<8x128xf32>
    %8 = tpu.matmul %3, %7, %cst {dimension_numbers = #tpu.dot_dimension_numbers<[1], [0], [0], [1], [0, 0, 1, 1], [], []>} : vector<8x32xf32>, vector<32x128xf32>, vector<8x128xf32> -> vector<8x128xf32>
    %9 = arith.addf %6, %8 : vector<8x128xf32>
    %10 = vector.extract_strided_slice %9 {offsets = [0, 0], sizes = [8, 32], strides = [1, 1]} : vector<8x128xf32> to vector<8x32xf32>
    %11 = arith.negf %10 : vector<8x32xf32>
    %12 = math.exp %11 : vector<8x32xf32>
    %cst_9 = arith.constant 1.000000e+00 : f32
    %13 = vector.broadcast %cst_9 : f32 to vector<8x32xf32>
    %14 = arith.addf %13, %12 : vector<8x32xf32>
    %15 = arith.divf %13, %14 : vector<8x32xf32>
    %16 = vector.extract_strided_slice %9 {offsets = [0, 32], sizes = [8, 32], strides = [1, 1]} : vector<8x128xf32> to vector<8x32xf32>
    %17 = arith.negf %16 : vector<8x32xf32>
    %18 = math.exp %17 : vector<8x32xf32>
    %cst_10 = arith.constant 1.000000e+00 : f32
    %19 = vector.broadcast %cst_10 : f32 to vector<8x32xf32>
    %20 = arith.addf %19, %18 : vector<8x32xf32>
    %21 = arith.divf %19, %20 : vector<8x32xf32>
    %22 = vector.extract_strided_slice %9 {offsets = [0, 64], sizes = [8, 32], strides = [1, 1]} : vector<8x128xf32> to vector<8x32xf32>
    %23 = math.tanh %22 : vector<8x32xf32>
    %24 = vector.extract_strided_slice %9 {offsets = [0, 96], sizes = [8, 32], strides = [1, 1]} : vector<8x128xf32> to vector<8x32xf32>
    %25 = arith.negf %24 : vector<8x32xf32>
    %26 = math.exp %25 : vector<8x32xf32>
    %cst_11 = arith.constant 1.000000e+00 : f32
    %27 = vector.broadcast %cst_11 : f32 to vector<8x32xf32>
    %28 = arith.addf %27, %26 : vector<8x32xf32>
    %29 = arith.divf %27, %28 : vector<8x32xf32>
    %30 = arith.mulf %21, %4 : vector<8x32xf32>
    %31 = arith.mulf %15, %23 : vector<8x32xf32>
    %32 = arith.addf %30, %31 : vector<8x32xf32>
    %33 = math.tanh %32 : vector<8x32xf32>
    %34 = arith.mulf %29, %33 : vector<8x32xf32>
    %c0_12 = arith.constant 0 : index
    %c0_13 = arith.constant 0 : index
    %35 = vector.load %arg6[%c0_12, %c0_13] : memref<8x32xf32, #tpu.memory_space<vmem>>, vector<8x32xf32>
    tpu.vector_store %arg6[%c0_12, %c0_13], %34 {strides = array<i32>} : memref<8x32xf32, #tpu.memory_space<vmem>>, vector<8x32xf32>,
    %c0_14 = arith.constant 0 : index
    %c0_15 = arith.constant 0 : index
    %36 = vector.load %arg7[%c0_14, %c0_15] : memref<8x32xf32, #tpu.memory_space<vmem>>, vector<8x32xf32>
    tpu.vector_store %arg7[%c0_14, %c0_15], %32 {strides = array<i32>} : memref<8x32xf32, #tpu.memory_space<vmem>>, vector<8x32xf32>,
    %c7_i32 = arith.constant 7 : i32
    %37 = arith.cmpi eq, %arg0, %c7_i32 : i32
    %38 = arith.extui %37 : i1 to i32
    %c0_i32_16 = arith.constant 0 : i32
    %39 = arith.cmpi ne, %38, %c0_i32_16 : i32
    scf.if %39 {
      %c0_17 = arith.constant 0 : index
      %c0_18 = arith.constant 0 : index
      %40 = vector.load %arg3[%c0_17, %c0_18] : memref<32x128xf32, #tpu.memory_space<vmem>>, vector<32x128xf32>
      %cst_19 = arith.constant dense<0.000000e+00> : vector<8x128xf32>
      %41 = tpu.matmul %34, %40, %cst_19 {dimension_numbers = #tpu.dot_dimension_numbers<[1], [0], [0], [1], [0, 0, 1, 1], [], []>} : vector<8x32xf32>, vector<32x128xf32>, vector<8x128xf32> -> vector<8x128xf32>
      %c0_20 = arith.constant 0 : index
      %c0_21 = arith.constant 0 : index
      %42 = vector.load %arg4[%c0_20, %c0_21] : memref<1x128xf32, #tpu.memory_space<vmem>>, vector<1x128xf32>
      %43 = vector.broadcast %42 : vector<1x128xf32> to vector<8x128xf32>
      %44 = arith.addf %41, %43 : vector<8x128xf32>
      %c0_22 = arith.constant 0 : index
      %c0_23 = arith.constant 0 : index
      %45 = vector.load %arg5[%c0_22, %c0_23] : memref<8x128xf32, #tpu.memory_space<vmem>>, vector<8x128xf32>
      tpu.vector_store %arg5[%c0_22, %c0_23], %44 {strides = array<i32>} : memref<8x128xf32, #tpu.memory_space<vmem>>, vector<8x128xf32>,
    } else {
    }
    return
  }
  func.func @transform_0(%arg0: i32) -> (i32, i32, i32) {
    %c0_i32 = arith.constant 0 : i32
    %c0_i32_0 = arith.constant 0 : i32
    %c0_i32_1 = arith.constant 0 : i32
    return %arg0, %c0_i32, %c0_i32_0 : i32, i32, i32
  }
  func.func @transform_1(%arg0: i32) -> (i32, i32) {
    %c0_i32 = arith.constant 0 : i32
    %c0_i32_0 = arith.constant 0 : i32
    %c0_i32_1 = arith.constant 0 : i32
    return %c0_i32, %c0_i32_0 : i32, i32
  }
  func.func @transform_2(%arg0: i32) -> (i32, i32) {
    %c0_i32 = arith.constant 0 : i32
    %c0_i32_0 = arith.constant 0 : i32
    %c0_i32_1 = arith.constant 0 : i32
    return %c0_i32, %c0_i32_0 : i32, i32
  }
  func.func @transform_3(%arg0: i32) -> (i32, i32) {
    %c0_i32 = arith.constant 0 : i32
    %c0_i32_0 = arith.constant 0 : i32
    %c0_i32_1 = arith.constant 0 : i32
    return %c0_i32, %c0_i32_0 : i32, i32
  }
  func.func @transform_4(%arg0: i32) -> (i32, i32) {
    %c0_i32 = arith.constant 0 : i32
    %c0_i32_0 = arith.constant 0 : i32
    %c0_i32_1 = arith.constant 0 : i32
    return %c0_i32, %c0_i32_0 : i32, i32
  }
}

</mosaic_0001>

<llo_original>
// kernel: torch_lstm_forward.2
$region0: #{torch_lstm_forward.2}
  #allocation0 [shape = 'u32[]', space=smem, size = 0x4, offset = 0x4, fixed_abs, tag = 'smem constant byte address 0x4 - core index']
  #allocation1 [shape = 'u32[72,128]{1,0:T(1,128)}', space=vmem, size = 0x9000, scoped, tag = 'internal scratch']
  %s0 = inlined_call_operand.vmem [shape: f32[8,8,32], index: 0, kind: input, shape index: {}]
  %s1 = inlined_call_operand.vmem [shape: f32[32,128], index: 1, kind: input, shape index: {}]
  %s2 = inlined_call_operand.vmem [shape: f32[1,128], index: 2, kind: input, shape index: {}]
  %s3 = inlined_call_operand.vmem [shape: f32[8,8,128], index: 3, kind: output, shape index: {}]
  %s4 = sld [smem:[#allocation0]]
  $region45: #{torch_lstm_forward.2} parent=0
    _
  %s6 = ssub.s32 1, %s4
  %s7 = scalar_select 0, %s6, %s4
  loop: start=0, step=1, limit=10
  $region2: #{torch_lstm_forward.2} parent=0 // loop_pre_header
    _
  $region3: #{torch_lstm_forward.2} parent=0 // loop_header
    %s9 = sphi 0, %s13
    %p10 = scmp.ge.s32.totalorder %s9, 10
    %s19 = sphi 0, %s21
    %s22 = sphi 0, %s19
    %s23 = sphi 0, %s22
    %s39 = sphi 0, %s23
    %s43 = sphi 0, %s43
    %s45 = sphi 0, %s43
    %s46 = sphi 0, %s45
    %s60 = sphi 0, %s46
    %s64 = sphi 0, %s64
    %s66 = sphi 0, %s64
    %s67 = sphi 0, %s66
    %s81 = sphi 0, %s67
    %s87 = sphi 0, %s89
    %s90 = sphi 0, %s87
    %s91 = sphi 0, %s90
    %s107 = sphi 0, %s91
  $region4: #{torch_lstm_forward.2} parent=0 // loop_header_branch
    %12 = sbr.rel (%p10) target = $region8
  $region5: #{torch_lstm_forward.2} parent=0 // loop_body
    %s14 = ssub.s32 %s9, 1
    %s15 = ssub.s32 %s9, 2
    %s16 = sadd.s32 %s9, 1
    %s17 = ssub.s32 %s9, %s16
    %p18 = scmp.eq.s32.totalorder %s17, 0
    %s20 = sadd.s32 %s19, 1
    %s21 = scalar_select %p18, %s19, %s20
    %p24 = pneg %p18
    %p25 = scmp.eq.s32.totalorder %s9, 7
    %p26 = por %p24, %p25
    %p27 = scmp.ne.s32.totalorder %s19, %s22
    %p28 = scmp.eq.s32.totalorder %s9, 0
    %p29 = por %p27, %p28
    %p30 = scmp.ne.s32.totalorder %s19, %s22
    %p31 = scmp.eq.s32.totalorder %s14, 7
    %p32 = por %p30, %p31
    %p33 = scmp.ne.s32.totalorder %s22, %s23
    %p34 = scmp.eq.s32.totalorder %s14, 0
    %p35 = por %p33, %p34
    %p36 = scmp.ne.s32.totalorder %s22, %s23
    %p37 = scmp.eq.s32.totalorder %s15, 7
    %p38 = por %p36, %p37
    %p40 = scmp.ne.s32.totalorder %s23, %s39
    %p41 = scmp.eq.s32.totalorder %s15, 0
    %p42 = por %p40, %p41
    %s44 = sadd.s32 %s43, 1
    %p47 = scmp.eq.s32.totalorder %s9, 7
    %p48 = scmp.ne.s32.totalorder %s43, %s45
    %p49 = scmp.eq.s32.totalorder %s9, 0
    %p50 = por %p48, %p49
    %p51 = scmp.ne.s32.totalorder %s43, %s45
    %p52 = scmp.eq.s32.totalorder %s14, 7
    %p53 = por %p51, %p52
    %p54 = scmp.ne.s32.totalorder %s45, %s46
    %p55 = scmp.eq.s32.totalorder %s14, 0
    %p56 = por %p54, %p55
    %p57 = scmp.ne.s32.totalorder %s45, %s46
    %p58 = scmp.eq.s32.totalorder %s15, 7
    %p59 = por %p57, %p58
    %p61 = scmp.ne.s32.totalorder %s46, %s60
    %p62 = scmp.eq.s32.totalorder %s15, 0
    %p63 = por %p61, %p62
    %s65 = sadd.s32 %s64, 1
    %p68 = scmp.eq.s32.totalorder %s9, 7
    %p69 = scmp.ne.s32.totalorder %s64, %s66
    %p70 = scmp.eq.s32.totalorder %s9, 0
    %p71 = por %p69, %p70
    %p72 = scmp.ne.s32.totalorder %s64, %s66
    %p73 = scmp.eq.s32.totalorder %s14, 7
    %p74 = por %p72, %p73
    %p75 = scmp.ne.s32.totalorder %s66, %s67
    %p76 = scmp.eq.s32.totalorder %s14, 0
    %p77 = por %p75, %p76
    %p78 = scmp.ne.s32.totalorder %s66, %s67
    %p79 = scmp.eq.s32.totalorder %s15, 7
    %p80 = por %p78, %p79
    %p82 = scmp.ne.s32.totalorder %s67, %s81
    %p83 = scmp.eq.s32.totalorder %s15, 0
    %p84 = por %p82, %p83
    %s85 = ssub.s32 %s9, %s16
    %p86 = scmp.eq.s32.totalorder %s85, 0
    %s88 = sadd.s32 %s87, 1
    %s89 = scalar_select %p86, %s87, %s88
    %p92 = pneg %p86
    %p93 = scmp.eq.s32.totalorder %s9, 7
    %p94 = por %p92, %p93
    %p95 = scmp.ne.s32.totalorder %s87, %s90
    %p96 = scmp.eq.s32.totalorder %s9, 0
    %p97 = por %p95, %p96
    %p98 = scmp.ne.s32.totalorder %s87, %s90
    %p99 = scmp.eq.s32.totalorder %s14, 7
    %p100 = por %p98, %p99
    %p101 = scmp.ne.s32.totalorder %s90, %s91
    %p102 = scmp.eq.s32.totalorder %s14, 0
    %p103 = por %p101, %p102
    %p104 = scmp.ne.s32.totalorder %s90, %s91
    %p105 = scmp.eq.s32.totalorder %s15, 7
    %p106 = por %p104, %p105
    %p108 = scmp.ne.s32.totalorder %s91, %s107
    %p109 = scmp.eq.s32.totalorder %s15, 0
    %p110 = por %p108, %p109
    %p111 = scmp.le.s32.totalorder 1, %s9
    %p112 = scmp.lt.s32.totalorder %s9, 9
    %p113 = pnand %p111, %p112
    %p114 = pneg %p113
    // Predicated region
    $region9: #{torch_lstm_forward.2} parent=5 // pred_check
      _
    $region10: #{torch_lstm_forward.2} parent=5 // pred_check_branch
      %116 = sbr.rel (%p113) target = $region12
    $region11: #{torch_lstm_forward.2} parent=5 // pred_region
      %s117 = ssub.s32 %s9, 1
      // Predicated region
      $region13: #{torch_lstm_forward.2} parent=11 // pred_check
        %p118 = pneg %p56
      $region14: #{torch_lstm_forward.2} parent=11 // pred_check_branch
        %120 = sbr.rel (%p118) target = $region16
      $region15: #{torch_lstm_forward.2} parent=11 // pred_region
        _
      $region16: #{torch_lstm_forward.2} parent=11 // pred_fallthru
        _
      // Predicated region
      $region17: #{torch_lstm_forward.2} parent=11 // pred_check
        %p121 = pneg %p77
      $region18: #{torch_lstm_forward.2} parent=11 // pred_check_branch
        %123 = sbr.rel (%p121) target = $region20
      $region19: #{torch_lstm_forward.2} parent=11 // pred_region
        _
      $region20: #{torch_lstm_forward.2} parent=11 // pred_fallthru
        _
    $region12: #{torch_lstm_forward.2} parent=5 // pred_fallthru
      _
    %p124 = scmp.lt.s32.totalorder %s9, 8
    // Predicated region
    $region21: #{torch_lstm_forward.2} parent=5 // pred_check
      %p125 = pneg %p124
    $region22: #{torch_lstm_forward.2} parent=5 // pred_check_branch
      %127 = sbr.rel (%p125) target = $region24
    $region23: #{torch_lstm_forward.2} parent=5 // pred_region
      // Predicated region
      $region25: #{torch_lstm_forward.2} parent=23 // pred_check
        %p128 = pneg %p29
      $region26: #{torch_lstm_forward.2} parent=23 // pred_check_branch
        %130 = sbr.rel (%p128) target = $region28
      $region27: #{torch_lstm_forward.2} parent=23 // pred_region
        %p131 = scmp.lt.s32.totalorder %s9, 7
        %s132 = scalar_select %p131, %s9, 7
        %s133 = smul.addr %s132, 8
        %s134 = scalar_lea.vmem %s0, %s133
      $region28: #{torch_lstm_forward.2} parent=23 // pred_fallthru
        _
    $region24: #{torch_lstm_forward.2} parent=5 // pred_fallthru
      _
    %p135 = scmp.le.s32.totalorder 1, %s9
    %p136 = scmp.lt.s32.totalorder %s9, 9
    %p137 = pnand %p135, %p136
    %p138 = pneg %p137
    // Predicated region
    $region29: #{torch_lstm_forward.2} parent=5 // pred_check
      _
    $region30: #{torch_lstm_forward.2} parent=5 // pred_check_branch
      %140 = sbr.rel (%p137) target = $region32
    $region31: #{torch_lstm_forward.2} parent=5 // pred_region
      %s141 = ssub.s32 %s9, 1
      %p142 = scmp.lt.s32.totalorder %s14, 7
      %s143 = scalar_select %p142, %s14, 7
      %s144 = smul.addr %s143, 8
      %s145 = scalar_lea.vmem %s0, %s144
      %p146 = pneg %p35
      %p147 = pneg %p32
      %p148 = pneg %p56
      %p149 = pneg %p53
      %p150 = pneg %p77
      %p151 = pneg %p74
      %p152 = pneg %p103
      %p153 = pneg %p100
      %p154 = scmp.lt.s32.totalorder %s14, 7
      %s155 = scalar_select %p154, %s14, 7
      %s156 = smul.addr %s155, 8
      %s157 = scalar_lea.vmem %s3, %s156
      %p158 = scmp.lt.s32.totalorder %s14, 7
      %s159 = scalar_select %p158, %s14, 7
      %s160 = smul.addr %s159, 8
      %s161 = scalar_lea.vmem %s0, %s160
      %p162 = scmp.lt.s32.totalorder %s14, 7
      %s163 = scalar_select %p162, %s14, 7
      %s164 = smul.addr %s163, 8
      %s165 = scalar_lea.vmem %s3, %s164
      %v166 = vld [vmem:[%s161] sm:$0xff]
      %v167 = vld [vmem:[%s1] sm:$0xff]
      %v168 = vld [vmem:[%s1 + $0x8] sm:$0xff]
      %v169 = vld [vmem:[%s1 + $0x10] sm:$0xff]
      %v170 = vld [vmem:[%s1 + $0x18] sm:$0xff]
      %v171 = vld [vmem:[%s2] sm:$0x1]
      %v173 = vperm.slane %v171, 0
      %vm175 = vcmask 261120
      %v177 = vsel %vm175, %v166, 0
      %179 = vmatpush.msra.mxu0 0.0
      %180 = vmatpush.msra.mxu0 0.0
      %181 = vmatpush.msra.mxu0 0.0
      %182 = vmatpush.msra.mxu0 0.0
      %183 = vmatpush.msra.mxu0 0.0
      %184 = vmatpush.msra.mxu0 0.0
      %185 = vmatpush.msra.mxu0 0.0
      %186 = vmatpush.msra.mxu0 0.0
      %187 = vmatpush.msra.mxu0 0.0
      %188 = vmatpush.msra.mxu0 0.0
      %189 = vmatpush.msra.mxu0 0.0
      %190 = vmatpush.msra.mxu0 0.0
      %191 = vmatpush.msra.mxu0 %v170
      %192 = vmatpush.msra.mxu0 %v169
      %193 = vmatpush.msra.mxu0 %v168
      %194 = vmatpush.msra.mxu0 %v167
      %195 = vmatmul.f32.gmra.mxu0 %v177
      %v196 = vpop.f32.mrf.mxu0
      %v197 = vadd.f32 %v173, %v196
      %198 = vdwg.mxu0
      %199 = vst [vmem:[%s165] sm:$0xff] %v197
      %p200 = scmp.lt.s32.totalorder %s14, 7
      %s201 = scalar_select %p200, %s14, 7
      %s202 = smul.addr %s201, 8
      %s203 = scalar_lea.vmem %s3, %s202
      // Predicated region
      $region33: #{torch_lstm_forward.2} parent=31 // pred_check
        %p204 = pneg %p100
      $region34: #{torch_lstm_forward.2} parent=31 // pred_check_branch
        %206 = sbr.rel (%p204) target = $region36
      $region35: #{torch_lstm_forward.2} parent=31 // pred_region
        _
      $region36: #{torch_lstm_forward.2} parent=31 // pred_fallthru
        _
    $region32: #{torch_lstm_forward.2} parent=5 // pred_fallthru
      _
    %p207 = scmp.le.s32.totalorder 2, %s9
    // Predicated region
    $region37: #{torch_lstm_forward.2} parent=5 // pred_check
      %p208 = pneg %p207
    $region38: #{torch_lstm_forward.2} parent=5 // pred_check_branch
      %210 = sbr.rel (%p208) target = $region40
    $region39: #{torch_lstm_forward.2} parent=5 // pred_region
      %s211 = ssub.s32 %s9, 2
      // Predicated region
      $region41: #{torch_lstm_forward.2} parent=39 // pred_check
        %p212 = pneg %p106
      $region42: #{torch_lstm_forward.2} parent=39 // pred_check_branch
        %214 = sbr.rel (%p212) target = $region44
      $region43: #{torch_lstm_forward.2} parent=39 // pred_region
        %p215 = scmp.lt.s32.totalorder %s15, 7
        %s216 = scalar_select %p215, %s15, 7
        %s217 = smul.addr %s216, 8
        %s218 = scalar_lea.vmem %s3, %s217
      $region44: #{torch_lstm_forward.2} parent=39 // pred_fallthru
        _
    $region40: #{torch_lstm_forward.2} parent=5 // pred_fallthru
      _
  $region6: #{torch_lstm_forward.2} parent=0 // loop_footer
    %s13 = sadd.s32 1, %s9
  $region7: #{torch_lstm_forward.2} parent=0 // loop_footer_branch
    %8 = sbr.rel target = $region3
  $region8: #{torch_lstm_forward.2} parent=0 // loop_exit
    _

// kernel: torch_lstm_forward.3
$region0: #{torch_lstm_forward.3}
  #allocation0 [shape = 'u32[]', space=smem, size = 0x4, offset = 0x4, fixed_abs, tag = 'smem constant byte address 0x4 - core index']
  #allocation1 [shape = 'u32[72,128]{1,0:T(1,128)}', space=vmem, size = 0x9000, scoped, tag = 'internal scratch']
  #allocation2 [shape = 'f32[8,32]{1,0:T(8,128)}', space=vmem, size = 0x1000, scoped, tag = 'scratch operand']
  #allocation3 [shape = 'f32[8,32]{1,0:T(8,128)}', space=vmem, size = 0x1000, scoped, tag = 'scratch operand']
  %s0 = inlined_call_operand.vmem [shape: f32[8,8,128], index: 0, kind: input, shape index: {}]
  %s1 = inlined_call_operand.vmem [shape: f32[32,128], index: 1, kind: input, shape index: {}]
  %s2 = inlined_call_operand.vmem [shape: f32[32,128], index: 2, kind: input, shape index: {}]
  %s3 = inlined_call_operand.vmem [shape: f32[1,128], index: 3, kind: input, shape index: {}]
  %s4 = inlined_call_operand.hbm [shape: f32[8,128], index: 4, kind: output, shape index: {}]
  %s5 = sld [smem:[#allocation0]]
  $region57: #{torch_lstm_forward.3} parent=0
    _
  %s7 = ssub.s32 1, %s5
  %s8 = scalar_select 0, %s7, %s5
  $region1: #{torch_lstm_forward.3} parent=0
    #allocation4 [shape = 'u8[4096]{0}', space=vmem, size = 0x1000, scoped, tag = 'output window, operand 0, single buffered']
    #allocation5 [shape = 's32[2]{0}', space=sflag, size = 0x8, scoped, tag = 'scoped memory for torch_lstm_forward.3']
    %9 = vsyncpa [#allocation5], 0
    loop: start=0, step=1, limit=10
    $region2: #{torch_lstm_forward.3} parent=1 // loop_pre_header
      _
    $region3: #{torch_lstm_forward.3} parent=1 // loop_header
      %s11 = sphi 0, %s15
      %p12 = scmp.ge.s32.totalorder %s11, 10
      %s21 = sphi 0, %s23
      %s24 = sphi 0, %s21
      %s25 = sphi 0, %s24
      %s41 = sphi 0, %s25
      %s45 = sphi 0, %s45
      %s47 = sphi 0, %s45
      %s48 = sphi 0, %s47
      %s62 = sphi 0, %s48
      %s66 = sphi 0, %s66
      %s68 = sphi 0, %s66
      %s69 = sphi 0, %s68
      %s83 = sphi 0, %s69
      %s87 = sphi 0, %s87
      %s89 = sphi 0, %s87
      %s90 = sphi 0, %s89
      %s104 = sphi 0, %s90
      %s108 = sphi 0, %s108
      %s110 = sphi 0, %s108
      %s111 = sphi 0, %s110
      %s125 = sphi 0, %s111
    $region4: #{torch_lstm_forward.3} parent=1 // loop_header_branch
      %14 = sbr.rel (%p12) target = $region8
    $region5: #{torch_lstm_forward.3} parent=1 // loop_body
      %s16 = ssub.s32 %s11, 1
      %s17 = ssub.s32 %s11, 2
      %s18 = sadd.s32 %s11, 1
      %s19 = ssub.s32 %s11, %s18
      %p20 = scmp.eq.s32.totalorder %s19, 0
      %s22 = sadd.s32 %s21, 1
      %s23 = scalar_select %p20, %s21, %s22
      %p26 = pneg %p20
      %p27 = scmp.eq.s32.totalorder %s11, 7
      %p28 = por %p26, %p27
      %p29 = scmp.ne.s32.totalorder %s21, %s24
      %p30 = scmp.eq.s32.totalorder %s11, 0
      %p31 = por %p29, %p30
      %p32 = scmp.ne.s32.totalorder %s21, %s24
      %p33 = scmp.eq.s32.totalorder %s16, 7
      %p34 = por %p32, %p33
      %p35 = scmp.ne.s32.totalorder %s24, %s25
      %p36 = scmp.eq.s32.totalorder %s16, 0
      %p37 = por %p35, %p36
      %p38 = scmp.ne.s32.totalorder %s24, %s25
      %p39 = scmp.eq.s32.totalorder %s17, 7
      %p40 = por %p38, %p39
      %p42 = scmp.ne.s32.totalorder %s25, %s41
      %p43 = scmp.eq.s32.totalorder %s17, 0
      %p44 = por %p42, %p43
      %s46 = sadd.s32 %s45, 1
      %p49 = scmp.eq.s32.totalorder %s11, 7
      %p50 = scmp.ne.s32.totalorder %s45, %s47
      %p51 = scmp.eq.s32.totalorder %s11, 0
      %p52 = por %p50, %p51
      %p53 = scmp.ne.s32.totalorder %s45, %s47
      %p54 = scmp.eq.s32.totalorder %s16, 7
      %p55 = por %p53, %p54
      %p56 = scmp.ne.s32.totalorder %s47, %s48
      %p57 = scmp.eq.s32.totalorder %s16, 0
      %p58 = por %p56, %p57
      %p59 = scmp.ne.s32.totalorder %s47, %s48
      %p60 = scmp.eq.s32.totalorder %s17, 7
      %p61 = por %p59, %p60
      %p63 = scmp.ne.s32.totalorder %s48, %s62
      %p64 = scmp.eq.s32.totalorder %s17, 0
      %p65 = por %p63, %p64
      %s67 = sadd.s32 %s66, 1
      %p70 = scmp.eq.s32.totalorder %s11, 7
      %p71 = scmp.ne.s32.totalorder %s66, %s68
      %p72 = scmp.eq.s32.totalorder %s11, 0
      %p73 = por %p71, %p72
      %p74 = scmp.ne.s32.totalorder %s66, %s68
      %p75 = scmp.eq.s32.totalorder %s16, 7
      %p76 = por %p74, %p75
      %p77 = scmp.ne.s32.totalorder %s68, %s69
      %p78 = scmp.eq.s32.totalorder %s16, 0
      %p79 = por %p77, %p78
      %p80 = scmp.ne.s32.totalorder %s68, %s69
      %p81 = scmp.eq.s32.totalorder %s17, 7
      %p82 = por %p80, %p81
      %p84 = scmp.ne.s32.totalorder %s69, %s83
      %p85 = scmp.eq.s32.totalorder %s17, 0
      %p86 = por %p84, %p85
      %s88 = sadd.s32 %s87, 1
      %p91 = scmp.eq.s32.totalorder %s11, 7
      %p92 = scmp.ne.s32.totalorder %s87, %s89
      %p93 = scmp.eq.s32.totalorder %s11, 0
      %p94 = por %p92, %p93
      %p95 = scmp.ne.s32.totalorder %s87, %s89
      %p96 = scmp.eq.s32.totalorder %s16, 7
      %p97 = por %p95, %p96
      %p98 = scmp.ne.s32.totalorder %s89, %s90
      %p99 = scmp.eq.s32.totalorder %s16, 0
      %p100 = por %p98, %p99
      %p101 = scmp.ne.s32.totalorder %s89, %s90
      %p102 = scmp.eq.s32.totalorder %s17, 7
      %p103 = por %p101, %p102
      %p105 = scmp.ne.s32.totalorder %s90, %s104
      %p106 = scmp.eq.s32.totalorder %s17, 0
      %p107 = por %p105, %p106
      %s109 = sadd.s32 %s108, 1
      %p112 = scmp.eq.s32.totalorder %s11, 7
      %p113 = scmp.ne.s32.totalorder %s108, %s110
      %p114 = scmp.eq.s32.totalorder %s11, 0
      %p115 = por %p113, %p114
      %p116 = scmp.ne.s32.totalorder %s108, %s110
      %p117 = scmp.eq.s32.totalorder %s16, 7
      %p118 = por %p116, %p117
      %p119 = scmp.ne.s32.totalorder %s110, %s111
      %p120 = scmp.eq.s32.totalorder %s16, 0
      %p121 = por %p119, %p120
      %p122 = scmp.ne.s32.totalorder %s110, %s111
      %p123 = scmp.eq.s32.totalorder %s17, 7
      %p124 = por %p122, %p123
      %p126 = scmp.ne.s32.totalorder %s111, %s125
      %p127 = scmp.eq.s32.totalorder %s17, 0
      %p128 = por %p126, %p127
      %p129 = scmp.le.s32.totalorder 1, %s11
      %p130 = scmp.lt.s32.totalorder %s11, 9
      %p131 = pnand %p129, %p130
      %p132 = pneg %p131
      // Predicated region
      $region9: #{torch_lstm_forward.3} parent=5 // pred_check
        _
      $region10: #{torch_lstm_forward.3} parent=5 // pred_check_branch
        %134 = sbr.rel (%p131) target = $region12
      $region11: #{torch_lstm_forward.3} parent=5 // pred_region
        %s135 = ssub.s32 %s11, 1
        // Predicated region
        $region13: #{torch_lstm_forward.3} parent=11 // pred_check
          %p136 = pneg %p58
        $region14: #{torch_lstm_forward.3} parent=11 // pred_check_branch
          %138 = sbr.rel (%p136) target = $region16
        $region15: #{torch_lstm_forward.3} parent=11 // pred_region
          _
        $region16: #{torch_lstm_forward.3} parent=11 // pred_fallthru
          _
        // Predicated region
        $region17: #{torch_lstm_forward.3} parent=11 // pred_check
          %p139 = pneg %p79
        $region18: #{torch_lstm_forward.3} parent=11 // pred_check_branch
          %141 = sbr.rel (%p139) target = $region20
        $region19: #{torch_lstm_forward.3} parent=11 // pred_region
          _
        $region20: #{torch_lstm_forward.3} parent=11 // pred_fallthru
          _
        // Predicated region
        $region21: #{torch_lstm_forward.3} parent=11 // pred_check
          %p142 = pneg %p100
        $region22: #{torch_lstm_forward.3} parent=11 // pred_check_branch
          %144 = sbr.rel (%p142) target = $region24
        $region23: #{torch_lstm_forward.3} parent=11 // pred_region
          _
        $region24: #{torch_lstm_forward.3} parent=11 // pred_fallthru
          _
      $region12: #{torch_lstm_forward.3} parent=5 // pred_fallthru
        _
      %p145 = scmp.lt.s32.totalorder %s11, 8
      // Predicated region
      $region25: #{torch_lstm_forward.3} parent=5 // pred_check
        %p146 = pneg %p145
      $region26: #{torch_lstm_forward.3} parent=5 // pred_check_branch
        %148 = sbr.rel (%p146) target = $region28
      $region27: #{torch_lstm_forward.3} parent=5 // pred_region
        // Predicated region
        $region29: #{torch_lstm_forward.3} parent=27 // pred_check
          %p149 = pneg %p31
        $region30: #{torch_lstm_forward.3} parent=27 // pred_check_branch
          %151 = sbr.rel (%p149) target = $region32
        $region31: #{torch_lstm_forward.3} parent=27 // pred_region
          %p152 = scmp.lt.s32.totalorder %s11, 7
          %s153 = scalar_select %p152, %s11, 7
          %s154 = smul.addr %s153, 8
          %s155 = scalar_lea.vmem %s0, %s154
        $region32: #{torch_lstm_forward.3} parent=27 // pred_fallthru
          _
      $region28: #{torch_lstm_forward.3} parent=5 // pred_fallthru
        _
      %p156 = scmp.le.s32.totalorder 1, %s11
      %p157 = scmp.lt.s32.totalorder %s11, 9
      %p158 = pnand %p156, %p157
      %p159 = pneg %p158
      // Predicated region
      $region33: #{torch_lstm_forward.3} parent=5 // pred_check
        _
      $region34: #{torch_lstm_forward.3} parent=5 // pred_check_branch
        %161 = sbr.rel (%p158) target = $region36
      $region35: #{torch_lstm_forward.3} parent=5 // pred_region
        %s162 = ssub.s32 %s11, 1
        %p163 = scmp.lt.s32.totalorder %s16, 7
        %s164 = scalar_select %p163, %s16, 7
        %s165 = smul.addr %s164, 8
        %s166 = scalar_lea.vmem %s0, %s165
        %p167 = pneg %p37
        %p168 = pneg %p34
        %p169 = pneg %p58
        %p170 = pneg %p55
        %p171 = pneg %p79
        %p172 = pneg %p76
        %p173 = pneg %p100
        %p174 = pneg %p97
        %p175 = pneg %p121
        %p176 = pneg %p118
        %p177 = scmp.lt.s32.totalorder %s16, 7
        %s178 = scalar_select %p177, %s16, 7
        %s179 = smul.addr %s178, 8
        %s180 = scalar_lea.vmem %s0, %s179
        %p181 = scmp.eq.s32.totalorder %s16, 0
        // Predicated region
        $region37: #{torch_lstm_forward.3} parent=35 // pred_check
          %p182 = pneg %p181
        $region38: #{torch_lstm_forward.3} parent=35 // pred_check_branch
          %184 = sbr.rel (%p182) target = $region40
        $region39: #{torch_lstm_forward.3} parent=35 // pred_region
          %vm185 = vcmask 261120
          %186 = vst.msk [vmem:[#allocation2] sm:$0xff] %vm185, 0.0
          %187 = vst.msk [vmem:[#allocation3] sm:$0xff] %vm185, 0.0
        $region40: #{torch_lstm_forward.3} parent=35 // pred_fallthru
          _
        %v188 = vld [vmem:[#allocation2] sm:$0xff]
        %v189 = vld [vmem:[#allocation3] sm:$0xff]
        %v190 = vld [vmem:[%s180] sm:$0xff]
        %v191 = vld [vmem:[%s1] sm:$0xff]
        %v192 = vld [vmem:[%s1 + $0x8] sm:$0xff]
        %v193 = vld [vmem:[%s1 + $0x10] sm:$0xff]
        %v194 = vld [vmem:[%s1 + $0x18] sm:$0xff]
        %vm195 = vcmask 261120
        %v197 = vsel %vm195, %v188, 0
        %199 = vmatpush.msra.mxu0 0.0
        %200 = vmatpush.msra.mxu0 0.0
        %201 = vmatpush.msra.mxu0 0.0
        %202 = vmatpush.msra.mxu0 0.0
        %203 = vmatpush.msra.mxu0 0.0
        %204 = vmatpush.msra.mxu0 0.0
        %205 = vmatpush.msra.mxu0 0.0
        %206 = vmatpush.msra.mxu0 0.0
        %207 = vmatpush.msra.mxu0 0.0
        %208 = vmatpush.msra.mxu0 0.0
        %209 = vmatpush.msra.mxu0 0.0
        %210 = vmatpush.msra.mxu0 0.0
        %211 = vmatpush.msra.mxu0 %v194
        %212 = vmatpush.msra.mxu0 %v193
        %213 = vmatpush.msra.mxu0 %v192
        %214 = vmatpush.msra.mxu0 %v191
        %215 = vmatmul.f32.gmra.mxu0 %v197
        %v216 = vpop.f32.mrf.mxu0
        %v217 = vadd.f32 0.0, %v216
        %218 = vdwg.mxu0
        %v219 = vadd.f32 %v190, %v217
        %v220 = vxor.u32 %v219, 2147483648
        %v221 = vmul.f32 %v220, 1.442695
        %v222 = vpow.pop %v221
        %v223 = vadd.f32 %v222, 1.0
        %v224 = vrcp.pop %v223
        %v225 = vmul.f32 %v223, %v224
        %v226 = vsub.f32 1.0, %v225
        %v227 = vmul.f32 %v224, %v226
        %v228 = vadd.f32 %v224, %v227
        %vm229 = vweird.f32 %v223
        %vm230 = vweird.f32 %v224
        %vm231 = vmor %vm229, %vm230
        %v232 = vsel %vm231, %v224, %v228
        %v233 = vand.u32 2147483647, %v223
        %vm234 = vcmp.eq.f32.partialorder %v233, 8.507059e+37
        %v235 = vand.u32 %v223, 2147483648
        %v236 = vor.u32 1.1754944e-38, %v235
        %v237 = vsel %vm234, %v236, %v232
        %v238 = vmul.f32 1.0, %v237
        %v239 = vtanh.pop %v219
        %241 = vrot.lane.b32.xlu0 %v189, 32
        %v242 = vpop.permute.xlu0 %241
        %v244 = vmul.f32 %v238, %v242
        %246 = vrot.lane.b32.xlu0 %v239, 64
        %v247 = vpop.permute.xlu0 %246
        %v249 = vmul.f32 %v238, %v247
        %251 = vrot.lane.b32.xlu0 %v249, 32
        %v252 = vpop.permute.xlu0 %251
        %v254 = vadd.f32 %v244, %v252
        %v255 = vtanh.pop %v254
        %257 = vrot.lane.b32.xlu0 %v255, 64
        %v258 = vpop.permute.xlu0 %257
        %v260 = vmul.f32 %v238, %v258
        %262 = vrot.lane.b32.xlu0 %v260, 32
        %v263 = vpop.permute.xlu0 %262
        %265 = vst.msk [vmem:[#allocation2] sm:$0xff] %vm195, %v263
        %267 = vrot.lane.b32.xlu0 %v254, 96
        %v268 = vpop.permute.xlu0 %267
        %270 = vst.msk [vmem:[#allocation3] sm:$0xff] %vm195, %v268
        %p271 = scmp.eq.s32.totalorder %s16, 7
        // Predicated region
        $region41: #{torch_lstm_forward.3} parent=35 // pred_check
          %p272 = pneg %p271
        $region42: #{torch_lstm_forward.3} parent=35 // pred_check_branch
          %274 = sbr.rel (%p272) target = $region44
        $region43: #{torch_lstm_forward.3} parent=35 // pred_region
          %v275 = vld [vmem:[%s2] sm:$0xff]
          %v276 = vld [vmem:[%s2 + $0x8] sm:$0xff]
          %v277 = vld [vmem:[%s2 + $0x10] sm:$0xff]
          %v278 = vld [vmem:[%s2 + $0x18] sm:$0xff]
          %v279 = vld [vmem:[%s3] sm:$0x1]
          %v281 = vperm.slane %v279, 0
          %v283 = vsel %vm195, %v263, 0
          %285 = vmatpush.msra.mxu0 0.0
          %286 = vmatpush.msra.mxu0 0.0
          %287 = vmatpush.msra.mxu0 0.0
          %288 = vmatpush.msra.mxu0 0.0
          %289 = vmatpush.msra.mxu0 0.0
          %290 = vmatpush.msra.mxu0 0.0
          %291 = vmatpush.msra.mxu0 0.0
          %292 = vmatpush.msra.mxu0 0.0
          %293 = vmatpush.msra.mxu0 0.0
          %294 = vmatpush.msra.mxu0 0.0
          %295 = vmatpush.msra.mxu0 0.0
          %296 = vmatpush.msra.mxu0 0.0
          %297 = vmatpush.msra.mxu0 %v278
          %298 = vmatpush.msra.mxu0 %v277
          %299 = vmatpush.msra.mxu0 %v276
          %300 = vmatpush.msra.mxu0 %v275
          %301 = vmatmul.f32.gmra.mxu0 %v283
          %v302 = vpop.f32.mrf.mxu0
          %v303 = vadd.f32 %v281, %v302
          %304 = vdwg.mxu0
          %305 = vst [vmem:[#allocation4] sm:$0xff] %v303
        $region44: #{torch_lstm_forward.3} parent=35 // pred_fallthru
          _
        // Predicated region
        $region45: #{torch_lstm_forward.3} parent=35 // pred_check
          %p306 = pneg %p118
        $region46: #{torch_lstm_forward.3} parent=35 // pred_check_branch
          %308 = sbr.rel (%p306) target = $region48
        $region47: #{torch_lstm_forward.3} parent=35 // pred_region
          %310 = vsyncadd [#allocation5], 0
          %s312 = sshll.u32 [#allocation4], 4
          %s313 = int_to_ptr.vmem [resolvable:$true] %s312
          %s314 = sshll.u32 %s4, 4
          %s315 = int_to_ptr.hbm [resolvable:$true] %s314
          %317 = dma.vmem_to_hbm [thread:$0]  %s313, 128, %s315, [#allocation5]
        $region48: #{torch_lstm_forward.3} parent=35 // pred_fallthru
          _
        // Predicated region
        $region49: #{torch_lstm_forward.3} parent=35 // pred_check
          %p318 = pneg %p118
        $region50: #{torch_lstm_forward.3} parent=35 // pred_check_branch
          %320 = sbr.rel (%p318) target = $region52
        $region51: #{torch_lstm_forward.3} parent=35 // pred_region
          %322 = dma.done [#allocation5], 128
        $region52: #{torch_lstm_forward.3} parent=35 // pred_fallthru
          _
      $region36: #{torch_lstm_forward.3} parent=5 // pred_fallthru
        _
      %p323 = scmp.le.s32.totalorder 2, %s11
      // Predicated region
      $region53: #{torch_lstm_forward.3} parent=5 // pred_check
        %p324 = pneg %p323
      $region54: #{torch_lstm_forward.3} parent=5 // pred_check_branch
        %326 = sbr.rel (%p324) target = $region56
      $region55: #{torch_lstm_forward.3} parent=5 // pred_region
        %s327 = ssub.s32 %s11, 2
      $region56: #{torch_lstm_forward.3} parent=5 // pred_fallthru
        _
    $region6: #{torch_lstm_forward.3} parent=1 // loop_footer
      %s15 = sadd.s32 1, %s11
    $region7: #{torch_lstm_forward.3} parent=1 // loop_footer_branch
      %10 = sbr.rel target = $region3
    $region8: #{torch_lstm_forward.3} parent=1 // loop_exit
      _
    %328 = vsyncpa [#allocation5], 1
    %s329 = scalar_lea.sflag [#allocation5], 1
    %330 = vsyncpa %s329, 1

</llo_original>
